<compile_context>
chip_gen: v7x
topology: tpu7x:2x2x1
jax: 0.10.0
libtpu: 0.0.40
codegen_flags: <defaults>
</compile_context>

<pallas_src>
import functools

import jax
import jax.numpy as jnp
from jax import lax
from jax.experimental import pallas as pl
from jax.experimental.pallas import tpu as pltpu


_LANE = 128
_VMEM_BLOCK_BUDGET = 24 * 1024 * 1024   # bytes for double-buffered input blocks
_VMEM_LIMIT_BYTES = 40 * 1024 * 1024    # scoped VMEM limit (fits v5e/v6e/v7x)


def _cdiv(a, b):
    return (a + b - 1) // b


def _round_up(x, m):
    return _cdiv(x, m) * m


def _choose_tile_rows(n, c, pred_itemsize, tgt_itemsize, msk_itemsize):
    """Rows per grid step, sized against a VMEM budget (lane padding included)."""
    pred_lanes = _round_up(max(c, 1), _LANE)
    # VMEM bytes per block row: every minor dim pads to 128 lanes.
    per_row = pred_lanes * pred_itemsize + _LANE * (tgt_itemsize + msk_itemsize)
    r_max = max(8, (_VMEM_BLOCK_BUDGET // (2 * per_row)) // 8 * 8)  # x2 = double buffer
    if n <= 8:
        return n                       # single block spanning the full (tiny) array
    # Cap at cdiv(n, 2) so there are >= 2 grid steps (both v7x TCs get work).
    return min(r_max, _round_up(_cdiv(n, 2), 8))


def _write_partials(out_ref, num, den):
    # One unmasked, lane-dense (8, 128) store: [0,0]=num, [0,1]=den, rest 0.
    rows = lax.broadcasted_iota(jnp.int32, out_ref.shape, 0)
    cols = lax.broadcasted_iota(jnp.int32, out_ref.shape, 1)
    out_ref[...] = jnp.where(
        (rows == 0) & (cols == 0), num,
        jnp.where((rows == 0) & (cols == 1), den, 0.0))


def _nll_kernel_unweighted(pred_ref, target_ref, mask_ref, out_ref,
                           *, n_rows, tile_rows, ragged):
    pred = pred_ref[...].astype(jnp.float32)        # (R, C), upcast on VPU
    tgt = target_ref[...].astype(jnp.int32)         # (R, 1)
    msk = mask_ref[...].astype(jnp.float32)         # (R, 1)
    r, c = pred.shape

    cls = lax.broadcasted_iota(jnp.int32, (r, c), 1)      # lane iota = class id
    hit = cls == tgt                                      # (R, C)
    if ragged:                                            # mask OOB rows of last tile
        row = lax.broadcasted_iota(jnp.int32, (r, 1), 0)
        valid = (pl.program_id(0) * tile_rows + row) < n_rows
        msk = jnp.where(valid, msk, 0.0)
        hit = hit & valid

    sel = jnp.where(hit, pred, 0.0)                       # gather; garbage never touched
    num = -jnp.sum(sel * msk)                             # sum_j m_j * pred[j, t_j]
    den = jnp.sum(msk)                                    # sum(mask)
    _write_partials(out_ref, num, den)


def _nll_kernel_weighted(pred_ref, target_ref, mask_ref, weight_ref, out_ref,
                         *, n_rows, tile_rows, ragged):
    pred = pred_ref[...].astype(jnp.float32)        # (R, C)
    tgt = target_ref[...].astype(jnp.int32)         # (R, 1)
    msk = mask_ref[...].astype(jnp.float32)         # (R, 1)
    w = weight_ref[...].astype(jnp.float32)         # (1, C)
    r, c = pred.shape

    cls = lax.broadcasted_iota(jnp.int32, (r, c), 1)
    hit = cls == tgt
    if ragged:
        row = lax.broadcasted_iota(jnp.int32, (r, 1), 0)
        valid = (pl.program_id(0) * tile_rows + row) < n_rows
        msk = jnp.where(valid, msk, 0.0)
        hit = hit & valid

    picked = jnp.sum(jnp.where(hit, pred, 0.0), axis=1, keepdims=True)  # (R,1) pred[j,t_j]
    row_w = jnp.sum(jnp.where(hit, w, 0.0), axis=1, keepdims=True)      # (R,1) weight[t_j]
    wm = row_w * msk                                                    # (R,1)
    num = -jnp.sum(picked * wm)
    den = jnp.sum(wm)
    _write_partials(out_ref, num, den)


@functools.partial(jax.jit, static_argnames=("has_weight",))
def _masked_nll_loss_impl(pred, target, mask, weight, has_weight):
    n, c = pred.shape

    # Metadata-only reshapes; no dtype casts in the wrapper (kernel upcasts).
    target_col = target.reshape(n, 1)
    if mask.dtype == jnp.bool_:
        mask = mask.astype(jnp.float32)
    mask_col = mask.reshape(n, 1)

    tile_rows = _choose_tile_rows(n, c, pred.dtype.itemsize,
                                  target_col.dtype.itemsize, mask_col.dtype.itemsize)
    num_tiles = _cdiv(n, tile_rows)
    ragged = (n % tile_rows) != 0

    in_specs = [
        pl.BlockSpec((tile_rows, c), lambda i: (i, 0)),   # pred  (R, C), native layout
        pl.BlockSpec((tile_rows, 1), lambda i: (i, 0)),   # target (R, 1)
        pl.BlockSpec((tile_rows, 1), lambda i: (i, 0)),   # mask   (R, 1)
    ]
    args = [pred, target_col, mask_col]
    if has_weight:
        in_specs.append(pl.BlockSpec((1, c), lambda i: (0, 0)))
        args.append(weight.reshape(1, c))
        kernel = functools.partial(_nll_kernel_weighted,
                                   n_rows=n, tile_rows=tile_rows, ragged=ragged)
    else:
        kernel = functools.partial(_nll_kernel_unweighted,
                                   n_rows=n, tile_rows=tile_rows, ragged=ragged)

    out_bytes = num_tiles * 8 * 128 * 4
    bytes_accessed = (pred.size * pred.dtype.itemsize
                      + n * target_col.dtype.itemsize
                      + n * mask_col.dtype.itemsize
                      + (c * 4 if has_weight else 0)
                      + out_bytes)
    cost = pl.CostEstimate(flops=5 * n * c + 8 * n, transcendentals=0,
                           bytes_accessed=bytes_accessed)

    partials = pl.pallas_call(
        kernel,
        out_shape=jax.ShapeDtypeStruct((num_tiles * 8, 128), jnp.float32),
        grid_spec=pltpu.PrefetchScalarGridSpec(
            num_scalar_prefetch=0,
            grid=(num_tiles,),
            in_specs=in_specs,
            out_specs=pl.BlockSpec((8, 128), lambda i: (i, 0)),
        ),
        compiler_params=pltpu.CompilerParams(
            dimension_semantics=("parallel",),        # v7x: shard tiles across both TCs
            vmem_limit_bytes=_VMEM_LIMIT_BYTES),
        cost_estimate=cost,
    )(*args)

    # Tiny epilogue: non-[0,{0,1}] entries of each partial block are zero.
    num = jnp.sum(partials[:, 0])
    den = jnp.sum(partials[:, 1])
    return num / den


def masked_nll_loss(pred, target, mask, weight=None):
    """Pallas implementation of MaskedNLLLoss.forward.

    pred:   (N, C) log-probabilities (f32 or bf16), N = batch*seq_len
    target: (N,)   integer class indices
    mask:   (batch, seq_len) 0/1 mask
    weight: optional (C,) per-class weights
    returns scalar float32 loss
    """
    if weight is None:
        return _masked_nll_loss_impl(pred, target, mask, None, False)
    return _masked_nll_loss_impl(pred, target, mask, weight, True)


def _reference(pred, target, mask, weight=None):
    # pure-JAX reference mirroring the PyTorch module
    mask_ = mask.reshape(-1, 1).astype(jnp.float32)
    masked_pred = pred.astype(jnp.float32) * mask_
    picked = jnp.take_along_axis(masked_pred, target.reshape(-1, 1), axis=1)[:, 0]
    if weight is None:
        num = jnp.sum(-picked)
        den = jnp.sum(mask)
    else:
        w_t = weight[target]
        num = jnp.sum(-w_t * picked)
        den = jnp.sum(w_t * mask_[:, 0])
    return num / den


if __name__ == "__main__":
    key = jax.random.PRNGKey(0)
    n_classes = 7   # MELD emotion classes; exercises a non-128-multiple minor dim

    def make_case(batch, seq_len, k):
        n = batch * seq_len
        k1, k2, k3 = jax.random.split(k, 3)
        logits = jax.random.normal(k1, (n, n_classes), dtype=jnp.float32)
        pred = jax.nn.log_softmax(logits, axis=-1)          # log-probs, as NLLLoss expects
        target = jax.random.randint(k2, (n,), 0, n_classes, dtype=jnp.int32)
        mask = (jax.random.uniform(k3, (batch, seq_len)) > 0.3).astype(jnp.float32)
        return pred, target, mask

    weight = jnp.linspace(0.5, 1.5, n_classes, dtype=jnp.float32)
    k0, k1 = jax.random.split(key)

    # case 1: weight=None  (batch=2, seq_len=8 -> N=16, grid of 2 tiles)
    pred, target, mask = make_case(2, 8, k0)
    loss_none = masked_nll_loss(pred, target, mask, weight=None)
    jax.block_until_ready(loss_none)
    ref_none = _reference(pred, target, mask, weight=None)
    assert jnp.allclose(loss_none, ref_none, rtol=1e-5, atol=1e-5), (loss_none, ref_none)

    # case 2: with class weights
    loss_w = masked_nll_loss(pred, target, mask, weight=weight)
    jax.block_until_ready(loss_w)
    ref_w = _reference(pred, target, mask, weight=weight)
    assert jnp.allclose(loss_w, ref_w, rtol=1e-5, atol=1e-5), (loss_w, ref_w)

    # case 3: bf16 log-probs fed in native dtype (halved pred HBM traffic), upcast in-kernel
    pred_bf16 = pred.astype(jnp.bfloat16)
    loss_bf16 = masked_nll_loss(pred_bf16, target, mask, weight=weight)
    jax.block_until_ready(loss_bf16)
    ref_bf16 = _reference(pred_bf16.astype(jnp.float32), target, mask, weight=weight)
    assert jnp.allclose(loss_bf16, ref_bf16, rtol=1e-4, atol=1e-4), (loss_bf16, ref_bf16)

    # case 4: ragged N (batch=3, seq_len=5 -> N=15) exercises the in-kernel
    #         masking of the partial last tile (no padding in the wrapper).
    pred_r, target_r, mask_r = make_case(3, 5, k1)
    loss_r = masked_nll_loss(pred_r, target_r, mask_r, weight=weight)
    jax.block_until_ready(loss_r)
    ref_r = _reference(pred_r, target_r, mask_r, weight=weight)
    assert jnp.allclose(loss_r, ref_r, rtol=1e-5, atol=1e-5), (loss_r, ref_r)

    loss_rn = masked_nll_loss(pred_r, target_r, mask_r, weight=None)
    jax.block_until_ready(loss_rn)
    ref_rn = _reference(pred_r, target_r, mask_r, weight=None)
    assert jnp.allclose(loss_rn, ref_rn, rtol=1e-5, atol=1e-5), (loss_rn, ref_rn)

    print("KERNEL_OK")
</pallas_src>

<mosaic_0001>
module attributes {stable_mosaic.version = 11 : i64} {
  func.func @_nll_kernel_unweighted(%arg0: i32, %arg1: memref<8x7xf32, #tpu.memory_space<vmem>>, %arg2: memref<8x1xi32, #tpu.memory_space<vmem>>, %arg3: memref<8x1xf32, #tpu.memory_space<vmem>>, %arg4: memref<8x128xf32, #tpu.memory_space<vmem>>) attributes {dimension_semantics = [#tpu.dimension_semantics<parallel>], iteration_bounds = array<i64: 2>, scalar_prefetch = 0 : i64, scratch_operands = 0 : i64, tpu.core_type = #tpu.core_type<tc>, window_params = [{transform_indices = @transform_0, window_bounds = array<i64: 8, 7>}, {transform_indices = @transform_1, window_bounds = array<i64: 8, 1>}, {transform_indices = @transform_2, window_bounds = array<i64: 8, 1>}, {transform_indices = @transform_3, window_bounds = array<i64: 8, 128>}]} {
    %c0 = arith.constant 0 : index
    %c0_0 = arith.constant 0 : index
    %0 = vector.load %arg1[%c0, %c0_0] : memref<8x7xf32, #tpu.memory_space<vmem>>, vector<8x7xf32>
    %c0_1 = arith.constant 0 : index
    %c0_2 = arith.constant 0 : index
    %1 = vector.load %arg2[%c0_1, %c0_2] : memref<8x1xi32, #tpu.memory_space<vmem>>, vector<8x1xi32>
    %c0_3 = arith.constant 0 : index
    %c0_4 = arith.constant 0 : index
    %2 = vector.load %arg3[%c0_3, %c0_4] : memref<8x1xf32, #tpu.memory_space<vmem>>, vector<8x1xf32>
    %3 = tpu.iota {dimensions = array<i32: 1>} : vector<8x7xi32>
    %4 = vector.broadcast %1 : vector<8x1xi32> to vector<8x7xi32>
    %5 = arith.cmpi eq, %3, %4 : vector<8x7xi32>
    %cst = arith.constant 0.000000e+00 : f32
    %6 = vector.broadcast %cst : f32 to vector<8x7xf32>
    %7 = arith.select %5, %0, %6 : vector<8x7xi1>, vector<8x7xf32>
    %8 = vector.broadcast %2 : vector<8x1xf32> to vector<8x7xf32>
    %9 = arith.mulf %7, %8 : vector<8x7xf32>
    %10 = vector.shape_cast %9 : vector<8x7xf32> to vector<1x8x7xf32>
    %cst_5 = arith.constant dense<0.000000e+00> : vector<1xf32>
    %11 = vector.multi_reduction <add>, %10, %cst_5 [1, 2] : vector<1x8x7xf32> to vector<1xf32>
    %12 = vector.shape_cast %11 : vector<1xf32> to vector<1x1x1xf32>
    %13 = vector.extract %12[0, 0, 0] : f32 from vector<1x1x1xf32>
    %cst_6 = arith.constant 0.000000e+00 : f32
    %14 = arith.subf %cst_6, %13 : f32
    %15 = vector.shape_cast %2 : vector<8x1xf32> to vector<1x8x1xf32>
    %cst_7 = arith.constant dense<0.000000e+00> : vector<1xf32>
    %16 = vector.multi_reduction <add>, %15, %cst_7 [1, 2] : vector<1x8x1xf32> to vector<1xf32>
    %17 = vector.shape_cast %16 : vector<1xf32> to vector<1x1x1xf32>
    %18 = vector.extract %17[0, 0, 0] : f32 from vector<1x1x1xf32>
    %19 = tpu.iota {dimensions = array<i32: 0>} : vector<8x128xi32>
    %20 = tpu.iota {dimensions = array<i32: 1>} : vector<8x128xi32>
    %c0_i32 = arith.constant 0 : i32
    %21 = vector.broadcast %c0_i32 : i32 to vector<8x128xi32>
    %22 = arith.cmpi eq, %19, %21 : vector<8x128xi32>
    %c0_i32_8 = arith.constant 0 : i32
    %23 = vector.broadcast %c0_i32_8 : i32 to vector<8x128xi32>
    %24 = arith.cmpi eq, %20, %23 : vector<8x128xi32>
    %25 = arith.andi %22, %24 : vector<8x128xi1>
    %c0_i32_9 = arith.constant 0 : i32
    %26 = vector.broadcast %c0_i32_9 : i32 to vector<8x128xi32>
    %27 = arith.cmpi eq, %19, %26 : vector<8x128xi32>
    %c1_i32 = arith.constant 1 : i32
    %28 = vector.broadcast %c1_i32 : i32 to vector<8x128xi32>
    %29 = arith.cmpi eq, %20, %28 : vector<8x128xi32>
    %30 = arith.andi %27, %29 : vector<8x128xi1>
    %cst_10 = arith.constant 0.000000e+00 : f32
    %31 = vector.broadcast %18 : f32 to vector<8x128xf32>
    %32 = vector.broadcast %cst_10 : f32 to vector<8x128xf32>
    %33 = arith.select %30, %31, %32 : vector<8x128xi1>, vector<8x128xf32>
    %34 = vector.broadcast %14 : f32 to vector<8x128xf32>
    %35 = arith.select %25, %34, %33 : vector<8x128xi1>, vector<8x128xf32>
    %c0_11 = arith.constant 0 : index
    %c0_12 = arith.constant 0 : index
    %36 = vector.load %arg4[%c0_11, %c0_12] : memref<8x128xf32, #tpu.memory_space<vmem>>, vector<8x128xf32>
    tpu.vector_store %arg4[%c0_11, %c0_12], %35 {strides = array<i32>} : memref<8x128xf32, #tpu.memory_space<vmem>>, vector<8x128xf32>,
    return
  }
  func.func @transform_0(%arg0: i32) -> (i32, i32) {
    %c0_i32 = arith.constant 0 : i32
    %c0_i32_0 = arith.constant 0 : i32
    return %arg0, %c0_i32 : i32, i32
  }
  func.func @transform_1(%arg0: i32) -> (i32, i32) {
    %c0_i32 = arith.constant 0 : i32
    %c0_i32_0 = arith.constant 0 : i32
    return %arg0, %c0_i32 : i32, i32
  }
  func.func @transform_2(%arg0: i32) -> (i32, i32) {
    %c0_i32 = arith.constant 0 : i32
    %c0_i32_0 = arith.constant 0 : i32
    return %arg0, %c0_i32 : i32, i32
  }
  func.func @transform_3(%arg0: i32) -> (i32, i32) {
    %c0_i32 = arith.constant 0 : i32
    %c0_i32_0 = arith.constant 0 : i32
    return %arg0, %c0_i32 : i32, i32
  }
}

</mosaic_0001>

<llo_original>
// kernel: _masked_nll_loss_impl.1
$region0: #{_masked_nll_loss_impl.1}
  #allocation0 [shape = 'u32[]', space=smem, size = 0x4, offset = 0x4, fixed_abs, tag = 'smem constant byte address 0x4 - core index']
  #allocation1 [shape = 'u32[144,128]{1,0:T(1,128)}', space=vmem, size = 0x12000, scoped, tag = 'internal scratch']
  %s0 = inlined_call_operand.vmem [shape: f32[16,7], index: 0, kind: input, shape index: {}]
  %s1 = inlined_call_operand.vmem [shape: s32[16,1], index: 1, kind: input, shape index: {}]
  %s2 = inlined_call_operand.vmem [shape: f32[16,1], index: 2, kind: input, shape index: {}]
  %s3 = inlined_call_operand.vmem [shape: f32[16,128], index: 3, kind: output, shape index: {}]
  %s4 = sld [smem:[#allocation0]]
  $region45: #{_masked_nll_loss_impl.1} parent=0
    _
  %s6 = ssub.s32 1, %s4
  %s7 = scalar_select 0, %s6, %s4
  loop: start=0, step=1, limit=4
  $region2: #{_masked_nll_loss_impl.1} parent=0 // loop_pre_header
    _
  $region3: #{_masked_nll_loss_impl.1} parent=0 // loop_header
    %s9 = sphi 0, %s13
    %p10 = scmp.ge.s32.totalorder %s9, 4
    %s19 = sphi 0, %s21
    %s22 = sphi 0, %s19
    %s23 = sphi 0, %s22
    %s39 = sphi 0, %s23
    %s45 = sphi 0, %s47
    %s48 = sphi 0, %s45
    %s49 = sphi 0, %s48
    %s65 = sphi 0, %s49
    %s71 = sphi 0, %s73
    %s74 = sphi 0, %s71
    %s75 = sphi 0, %s74
    %s91 = sphi 0, %s75
    %s97 = sphi 0, %s99
    %s100 = sphi 0, %s97
    %s101 = sphi 0, %s100
    %s117 = sphi 0, %s101
  $region4: #{_masked_nll_loss_impl.1} parent=0 // loop_header_branch
    %12 = sbr.rel (%p10) target = $region8
  $region5: #{_masked_nll_loss_impl.1} parent=0 // loop_body
    %s14 = ssub.s32 %s9, 1
    %s15 = ssub.s32 %s9, 2
    %s16 = sadd.s32 %s9, 1
    %s17 = ssub.s32 %s9, %s16
    %p18 = scmp.eq.s32.totalorder %s17, 0
    %s20 = sadd.s32 %s19, 1
    %s21 = scalar_select %p18, %s19, %s20
    %p24 = pneg %p18
    %p25 = scmp.eq.s32.totalorder %s9, 1
    %p26 = por %p24, %p25
    %p27 = scmp.ne.s32.totalorder %s19, %s22
    %p28 = scmp.eq.s32.totalorder %s9, 0
    %p29 = por %p27, %p28
    %p30 = scmp.ne.s32.totalorder %s19, %s22
    %p31 = scmp.eq.s32.totalorder %s14, 1
    %p32 = por %p30, %p31
    %p33 = scmp.ne.s32.totalorder %s22, %s23
    %p34 = scmp.eq.s32.totalorder %s14, 0
    %p35 = por %p33, %p34
    %p36 = scmp.ne.s32.totalorder %s22, %s23
    %p37 = scmp.eq.s32.totalorder %s15, 1
    %p38 = por %p36, %p37
    %p40 = scmp.ne.s32.totalorder %s23, %s39
    %p41 = scmp.eq.s32.totalorder %s15, 0
    %p42 = por %p40, %p41
    %s43 = ssub.s32 %s9, %s16
    %p44 = scmp.eq.s32.totalorder %s43, 0
    %s46 = sadd.s32 %s45, 1
    %s47 = scalar_select %p44, %s45, %s46
    %p50 = pneg %p44
    %p51 = scmp.eq.s32.totalorder %s9, 1
    %p52 = por %p50, %p51
    %p53 = scmp.ne.s32.totalorder %s45, %s48
    %p54 = scmp.eq.s32.totalorder %s9, 0
    %p55 = por %p53, %p54
    %p56 = scmp.ne.s32.totalorder %s45, %s48
    %p57 = scmp.eq.s32.totalorder %s14, 1
    %p58 = por %p56, %p57
    %p59 = scmp.ne.s32.totalorder %s48, %s49
    %p60 = scmp.eq.s32.totalorder %s14, 0
    %p61 = por %p59, %p60
    %p62 = scmp.ne.s32.totalorder %s48, %s49
    %p63 = scmp.eq.s32.totalorder %s15, 1
    %p64 = por %p62, %p63
    %p66 = scmp.ne.s32.totalorder %s49, %s65
    %p67 = scmp.eq.s32.totalorder %s15, 0
    %p68 = por %p66, %p67
    %s69 = ssub.s32 %s9, %s16
    %p70 = scmp.eq.s32.totalorder %s69, 0
    %s72 = sadd.s32 %s71, 1
    %s73 = scalar_select %p70, %s71, %s72
    %p76 = pneg %p70
    %p77 = scmp.eq.s32.totalorder %s9, 1
    %p78 = por %p76, %p77
    %p79 = scmp.ne.s32.totalorder %s71, %s74
    %p80 = scmp.eq.s32.totalorder %s9, 0
    %p81 = por %p79, %p80
    %p82 = scmp.ne.s32.totalorder %s71, %s74
    %p83 = scmp.eq.s32.totalorder %s14, 1
    %p84 = por %p82, %p83
    %p85 = scmp.ne.s32.totalorder %s74, %s75
    %p86 = scmp.eq.s32.totalorder %s14, 0
    %p87 = por %p85, %p86
    %p88 = scmp.ne.s32.totalorder %s74, %s75
    %p89 = scmp.eq.s32.totalorder %s15, 1
    %p90 = por %p88, %p89
    %p92 = scmp.ne.s32.totalorder %s75, %s91
    %p93 = scmp.eq.s32.totalorder %s15, 0
    %p94 = por %p92, %p93
    %s95 = ssub.s32 %s9, %s16
    %p96 = scmp.eq.s32.totalorder %s95, 0
    %s98 = sadd.s32 %s97, 1
    %s99 = scalar_select %p96, %s97, %s98
    %p102 = pneg %p96
    %p103 = scmp.eq.s32.totalorder %s9, 1
    %p104 = por %p102, %p103
    %p105 = scmp.ne.s32.totalorder %s97, %s100
    %p106 = scmp.eq.s32.totalorder %s9, 0
    %p107 = por %p105, %p106
    %p108 = scmp.ne.s32.totalorder %s97, %s100
    %p109 = scmp.eq.s32.totalorder %s14, 1
    %p110 = por %p108, %p109
    %p111 = scmp.ne.s32.totalorder %s100, %s101
    %p112 = scmp.eq.s32.totalorder %s14, 0
    %p113 = por %p111, %p112
    %p114 = scmp.ne.s32.totalorder %s100, %s101
    %p115 = scmp.eq.s32.totalorder %s15, 1
    %p116 = por %p114, %p115
    %p118 = scmp.ne.s32.totalorder %s101, %s117
    %p119 = scmp.eq.s32.totalorder %s15, 0
    %p120 = por %p118, %p119
    %p121 = scmp.le.s32.totalorder 1, %s9
    %p122 = scmp.lt.s32.totalorder %s9, 3
    %p123 = pnand %p121, %p122
    %p124 = pneg %p123
    // Predicated region
    $region9: #{_masked_nll_loss_impl.1} parent=5 // pred_check
      _
    $region10: #{_masked_nll_loss_impl.1} parent=5 // pred_check_branch
      %126 = sbr.rel (%p123) target = $region12
    $region11: #{_masked_nll_loss_impl.1} parent=5 // pred_region
      %s127 = ssub.s32 %s9, 1
    $region12: #{_masked_nll_loss_impl.1} parent=5 // pred_fallthru
      _
    %p128 = scmp.lt.s32.totalorder %s9, 2
    // Predicated region
    $region13: #{_masked_nll_loss_impl.1} parent=5 // pred_check
      %p129 = pneg %p128
    $region14: #{_masked_nll_loss_impl.1} parent=5 // pred_check_branch
      %131 = sbr.rel (%p129) target = $region16
    $region15: #{_masked_nll_loss_impl.1} parent=5 // pred_region
      // Predicated region
      $region17: #{_masked_nll_loss_impl.1} parent=15 // pred_check
        %p132 = pneg %p29
      $region18: #{_masked_nll_loss_impl.1} parent=15 // pred_check_branch
        %134 = sbr.rel (%p132) target = $region20
      $region19: #{_masked_nll_loss_impl.1} parent=15 // pred_region
        %p135 = scmp.lt.s32.totalorder %s9, 1
        %s136 = scalar_select %p135, %s9, 1
        %s137 = smul.addr %s136, 8
        %s138 = scalar_lea.vmem %s0, %s137
      $region20: #{_masked_nll_loss_impl.1} parent=15 // pred_fallthru
        _
      // Predicated region
      $region21: #{_masked_nll_loss_impl.1} parent=15 // pred_check
        %p139 = pneg %p55
      $region22: #{_masked_nll_loss_impl.1} parent=15 // pred_check_branch
        %141 = sbr.rel (%p139) target = $region24
      $region23: #{_masked_nll_loss_impl.1} parent=15 // pred_region
        %p142 = scmp.lt.s32.totalorder %s9, 1
        %s143 = scalar_select %p142, %s9, 1
        %s144 = smul.addr %s143, 8
        %s145 = scalar_lea.vmem %s1, %s144
      $region24: #{_masked_nll_loss_impl.1} parent=15 // pred_fallthru
        _
      // Predicated region
      $region25: #{_masked_nll_loss_impl.1} parent=15 // pred_check
        %p146 = pneg %p81
      $region26: #{_masked_nll_loss_impl.1} parent=15 // pred_check_branch
        %148 = sbr.rel (%p146) target = $region28
      $region27: #{_masked_nll_loss_impl.1} parent=15 // pred_region
        %p149 = scmp.lt.s32.totalorder %s9, 1
        %s150 = scalar_select %p149, %s9, 1
        %s151 = smul.addr %s150, 8
        %s152 = scalar_lea.vmem %s2, %s151
      $region28: #{_masked_nll_loss_impl.1} parent=15 // pred_fallthru
        _
    $region16: #{_masked_nll_loss_impl.1} parent=5 // pred_fallthru
      _
    %p153 = scmp.le.s32.totalorder 1, %s9
    %p154 = scmp.lt.s32.totalorder %s9, 3
    %p155 = pnand %p153, %p154
    %p156 = pneg %p155
    // Predicated region
    $region29: #{_masked_nll_loss_impl.1} parent=5 // pred_check
      _
    $region30: #{_masked_nll_loss_impl.1} parent=5 // pred_check_branch
      %158 = sbr.rel (%p155) target = $region32
    $region31: #{_masked_nll_loss_impl.1} parent=5 // pred_region
      %s159 = ssub.s32 %s9, 1
      %p160 = scmp.lt.s32.totalorder %s14, 1
      %s161 = scalar_select %p160, %s14, 1
      %s162 = smul.addr %s161, 8
      %s163 = scalar_lea.vmem %s0, %s162
      %p164 = pneg %p35
      %p165 = pneg %p32
      %p166 = scmp.lt.s32.totalorder %s14, 1
      %s167 = scalar_select %p166, %s14, 1
      %s168 = smul.addr %s167, 8
      %s169 = scalar_lea.vmem %s1, %s168
      %p170 = pneg %p61
      %p171 = pneg %p58
      %p172 = scmp.lt.s32.totalorder %s14, 1
      %s173 = scalar_select %p172, %s14, 1
      %s174 = smul.addr %s173, 8
      %s175 = scalar_lea.vmem %s2, %s174
      %p176 = pneg %p87
      %p177 = pneg %p84
      %p178 = pneg %p113
      %p179 = pneg %p110
      %p180 = scmp.lt.s32.totalorder %s14, 1
      %s181 = scalar_select %p180, %s14, 1
      %s182 = smul.addr %s181, 8
      %s183 = scalar_lea.vmem %s3, %s182
      %p184 = scmp.lt.s32.totalorder %s14, 1
      %s185 = scalar_select %p184, %s14, 1
      %s186 = smul.addr %s185, 8
      %s187 = scalar_lea.vmem %s0, %s186
      %p188 = scmp.lt.s32.totalorder %s14, 1
      %s189 = scalar_select %p188, %s14, 1
      %s190 = smul.addr %s189, 8
      %s191 = scalar_lea.vmem %s1, %s190
      %p192 = scmp.lt.s32.totalorder %s14, 1
      %s193 = scalar_select %p192, %s14, 1
      %s194 = smul.addr %s193, 8
      %s195 = scalar_lea.vmem %s2, %s194
      %p196 = scmp.lt.s32.totalorder %s14, 1
      %s197 = scalar_select %p196, %s14, 1
      %s198 = smul.addr %s197, 8
      %s199 = scalar_lea.vmem %s3, %s198
      %v200 = vld [vmem:[%s187] sm:$0xff]
      %v201 = vld [vmem:[%s191] sm:$0xff]
      %v202 = vld [vmem:[%s195] sm:$0xff]
      %v203 = vlaneseq
      %v204 = vand.u32 %v203, 127
      %205 = vset.pattern.permute.xlu0 0
      %206 = vperm.xlu0 %205, %v201
      %v207 = vpop.permute.xlu0 %206
      %vm208 = vcmp.eq.s32.totalorder %v204, %v207
      %v209 = vsel %vm208, %v200, 0.0
      %211 = vset.pattern.permute.xlu0 0
      %212 = vperm.xlu0 %211, %v202
      %v213 = vpop.permute.xlu0 %212
      %v215 = vmul.f32 %v209, %v213
      %vm216 = vcmask 56320
      %v217 = vsel %vm216, %v215, 0.0
      %218 = vadd.xlane.f32.xlu0 %v217
      %v219 = vpop.xlane.xlu0 %218
      %v220 = vrot.slane %v219, 4
      %v221 = vadd.f32 %v219, %v220
      %v222 = vrot.slane %v221, 2
      %v223 = vadd.f32 %v221, %v222
      %v224 = vrot.slane %v223, 1
      %v225 = vadd.f32 %v223, %v224
      %s226 = vtos %v225
      %s227 = ssub.f32 0.0, %s226
      %vm228 = vcmask 7168
      %v229 = vsel %vm228, %v202, 0.0
      %230 = vadd.xlane.f32.xlu0 %v229
      %v231 = vpop.xlane.xlu0 %230
      %v232 = vrot.slane %v231, 4
      %v233 = vadd.f32 %v231, %v232
      %v234 = vrot.slane %v233, 2
      %v235 = vadd.f32 %v233, %v234
      %v236 = vrot.slane %v235, 1
      %v237 = vadd.f32 %v235, %v236
      %s238 = vtos %v237
      %v239 = vlaneseq
      %v240 = vshrl.u32 %v239, 7
      %vm241 = vcmp.eq.s32.totalorder %v240, 0
      %vm242 = vcmp.eq.s32.totalorder %v204, 0
      %vm243 = vmand %vm241, %vm242
      %vm244 = vcmp.eq.s32.totalorder %v204, 1
      %vm245 = vmand %vm241, %vm244
      %v246 = vstv %s238
      %v247 = vsel %vm245, %v246, 0.0
      %v248 = vstv %s227
      %v249 = vsel %vm243, %v248, %v247
      %250 = vst [vmem:[%s199] sm:$0xff] %v249
      %p251 = scmp.lt.s32.totalorder %s14, 1
      %s252 = scalar_select %p251, %s14, 1
      %s253 = smul.addr %s252, 8
      %s254 = scalar_lea.vmem %s3, %s253
      // Predicated region
      $region33: #{_masked_nll_loss_impl.1} parent=31 // pred_check
        %p255 = pneg %p110
      $region34: #{_masked_nll_loss_impl.1} parent=31 // pred_check_branch
        %257 = sbr.rel (%p255) target = $region36
      $region35: #{_masked_nll_loss_impl.1} parent=31 // pred_region
        _
      $region36: #{_masked_nll_loss_impl.1} parent=31 // pred_fallthru
        _
    $region32: #{_masked_nll_loss_impl.1} parent=5 // pred_fallthru
      _
    %p258 = scmp.le.s32.totalorder 2, %s9
    // Predicated region
    $region37: #{_masked_nll_loss_impl.1} parent=5 // pred_check
      %p259 = pneg %p258
    $region38: #{_masked_nll_loss_impl.1} parent=5 // pred_check_branch
      %261 = sbr.rel (%p259) target = $region40
    $region39: #{_masked_nll_loss_impl.1} parent=5 // pred_region
      %s262 = ssub.s32 %s9, 2
      // Predicated region
      $region41: #{_masked_nll_loss_impl.1} parent=39 // pred_check
        %p263 = pneg %p116
      $region42: #{_masked_nll_loss_impl.1} parent=39 // pred_check_branch
        %265 = sbr.rel (%p263) target = $region44
      $region43: #{_masked_nll_loss_impl.1} parent=39 // pred_region
        %p266 = scmp.lt.s32.totalorder %s15, 1
        %s267 = scalar_select %p266, %s15, 1
        %s268 = smul.addr %s267, 8
        %s269 = scalar_lea.vmem %s3, %s268
      $region44: #{_masked_nll_loss_impl.1} parent=39 // pred_fallthru
        _
    $region40: #{_masked_nll_loss_impl.1} parent=5 // pred_fallthru
      _
  $region6: #{_masked_nll_loss_impl.1} parent=0 // loop_footer
    %s13 = sadd.s32 1, %s9
  $region7: #{_masked_nll_loss_impl.1} parent=0 // loop_footer_branch
    %8 = sbr.rel target = $region3
  $region8: #{_masked_nll_loss_impl.1} parent=0 // loop_exit
    _

</llo_original>
